<compile_context>
chip_gen: v6e
topology: v6e:2x2x1
jax: 0.10.0
libtpu: 0.0.40
codegen_flags: <defaults>
</compile_context>

<pallas_src>
import jax
import jax.numpy as jnp
from jax.experimental import pallas as pl
from jax.experimental.pallas import tpu as pltpu


def _round_up(x, m):
    return ((x + m - 1) // m) * m


def _cdiv(a, b):
    return (a + b - 1) // b


def dqn_kernel(x_ref, w1_ref, b1_ref, w2_ref, b2_ref, w3_ref, b3_ref, out_ref):
    # fc1 + ReLU: MXU matmul with f32 accumulation; elementwise math in f32.
    h1 = jnp.dot(x_ref[...].astype(w1_ref.dtype), w1_ref[...],
                 preferred_element_type=jnp.float32)
    h1 = jnp.maximum(h1 + b1_ref[...], 0.0)
    # fc2 + ReLU
    h2 = jnp.dot(h1.astype(w2_ref.dtype), w2_ref[...],
                 preferred_element_type=jnp.float32)
    h2 = jnp.maximum(h2 + b2_ref[...], 0.0)
    # fc3 (no activation). Output last dim == action_size (no lane padding in HBM).
    q = jnp.dot(h2.astype(w3_ref.dtype), w3_ref[...],
                preferred_element_type=jnp.float32)
    out_ref[...] = (q + b3_ref[...]).astype(out_ref.dtype)


def prepare_dqn_params(params, compute_dtype=jnp.bfloat16):
    """Pad the hidden dim to a lane-dense multiple of 128 and cast matmul inputs.

    Call ONCE at init / whenever the weights change, not inside the per-step
    forward. Weights are stored (in_features, out_features) so the kernel
    computes x @ W. The action (output) dim is intentionally NOT padded.
    """
    w1, b1, w2, b2, w3, b3 = params
    state_size, hidden = w1.shape
    action_size = w3.shape[1]
    h_pad = _round_up(hidden, 128)

    w1p = jnp.zeros((state_size, h_pad), compute_dtype).at[:, :hidden].set(
        w1.astype(compute_dtype))
    b1p = jnp.zeros((1, h_pad), jnp.float32).at[:, :hidden].set(
        b1.reshape(1, -1).astype(jnp.float32))
    w2p = jnp.zeros((h_pad, h_pad), compute_dtype).at[:hidden, :hidden].set(
        w2.astype(compute_dtype))
    b2p = jnp.zeros((1, h_pad), jnp.float32).at[:, :hidden].set(
        b2.reshape(1, -1).astype(jnp.float32))
    w3p = jnp.zeros((h_pad, action_size), compute_dtype).at[:hidden, :].set(
        w3.astype(compute_dtype))
    b3p = b3.reshape(1, -1).astype(jnp.float32)
    return (w1p, b1p, w2p, b2p, w3p, b3p)


def dqn_forward(x, prepared_params, *, tile_b=256):
    """x: (batch, state_size). prepared_params: output of prepare_dqn_params."""
    w1p, b1p, w2p, b2p, w3p, b3p = prepared_params
    batch, state_size = x.shape
    h_pad = w1p.shape[1]
    action_size = w3p.shape[1]

    # Tile: multiple of 8 sublanes; force >= 2 grid steps whenever batch allows
    # (pipelining + v7x dual-TC split). No explicit batch padding: the partial
    # edge block is masked on store.
    tb = _round_up(min(tile_b, batch), 8)
    if batch > 8 and _cdiv(batch, tb) < 2:
        tb = _round_up(_cdiv(batch, 2), 8)
    tb = max(8, tb)
    grid = (_cdiv(batch, tb),)

    # Weights/biases: constant block index -> DMA'd once, VMEM-resident all steps.
    def resident(shape):
        return pl.BlockSpec(shape, lambda i: (0, 0))

    flops = 2 * batch * (state_size * h_pad + h_pad * h_pad + h_pad * action_size)
    bytes_accessed = (
        x.nbytes
        + sum(a.nbytes for a in prepared_params)
        + batch * action_size * 4
    )

    return pl.pallas_call(
        dqn_kernel,
        out_shape=jax.ShapeDtypeStruct((batch, action_size), jnp.float32),
        grid=grid,
        in_specs=[
            pl.BlockSpec((tb, state_size), lambda i: (i, 0)),  # x streamed per tile
            resident(w1p.shape), resident(b1p.shape),
            resident(w2p.shape), resident(b2p.shape),
            resident(w3p.shape), resident(b3p.shape),
        ],
        out_specs=pl.BlockSpec((tb, action_size), lambda i: (i, 0)),
        compiler_params=pltpu.CompilerParams(
            dimension_semantics=("parallel",),  # shard batch tiles over TCs (v7x)
        ),
        cost_estimate=pl.CostEstimate(
            flops=flops, transcendentals=0, bytes_accessed=bytes_accessed),
    )(x, w1p, b1p, w2p, b2p, w3p, b3p)


def init_linear(key, fan_in, fan_out):
    # PyTorch nn.Linear default init: U(-1/sqrt(fan_in), 1/sqrt(fan_in)).
    kw, kb = jax.random.split(key)
    bound = 1.0 / jnp.sqrt(fan_in)
    # Stored as (in_features, out_features) so the kernel computes x @ W.
    w = jax.random.uniform(kw, (fan_in, fan_out), jnp.float32, -bound, bound)
    b = jax.random.uniform(kb, (1, fan_out), jnp.float32, -bound, bound)
    return w, b


def init_dqn_params(key, state_size, action_size, hidden_size=128):
    k1, k2, k3 = jax.random.split(key, 3)
    w1, b1 = init_linear(k1, state_size, hidden_size)
    w2, b2 = init_linear(k2, hidden_size, hidden_size)
    w3, b3 = init_linear(k3, hidden_size, action_size)
    return (w1, b1, w2, b2, w3, b3)


if __name__ == "__main__":
    key = jax.random.PRNGKey(0)
    state_size, action_size, hidden_size = 8, 4, 128  # spec default hidden=128
    batch = 200  # not a multiple of the tile -> exercises the masked edge block

    k_params, k_x = jax.random.split(key)
    params = init_dqn_params(k_params, state_size, action_size, hidden_size)
    x = jax.random.normal(k_x, (batch, state_size), dtype=jnp.float32)

    # Pure-JAX f32 reference (same math as the PyTorch module).
    w1, b1, w2, b2, w3, b3 = params
    ref = jnp.maximum(x @ w1 + b1, 0.0)
    ref = jnp.maximum(ref @ w2 + b2, 0.0)
    ref = ref @ w3 + b3

    # Exact path (f32 matmul inputs) — tight tolerance. grid=4 with a partial
    # last block (only 8 valid rows in step 3).
    p_f32 = prepare_dqn_params(params, compute_dtype=jnp.float32)
    out_f32 = dqn_forward(x, p_f32, tile_b=64)
    jax.block_until_ready(out_f32)
    assert out_f32.shape == (batch, action_size)
    assert jnp.allclose(out_f32, ref, atol=1e-5, rtol=1e-5)

    # Fast path (bf16 matmul inputs, f32 accumulation) — loose tolerance.
    # tile_b=256 > batch triggers the auto-split into 2 grid steps.
    p_bf16 = prepare_dqn_params(params, compute_dtype=jnp.bfloat16)
    out_bf16 = dqn_forward(x, p_bf16, tile_b=256)
    jax.block_until_ready(out_bf16)
    assert out_bf16.shape == (batch, action_size)
    assert jnp.allclose(out_bf16, ref, atol=5e-2, rtol=5e-2)

    # Tiny batch (< one sublane tile): single partial block, masked store only.
    out_small = dqn_forward(x[:5], p_f32)
    jax.block_until_ready(out_small)
    assert out_small.shape == (5, action_size)
    assert jnp.allclose(out_small, ref[:5], atol=1e-5, rtol=1e-5)

    print("KERNEL_OK")
</pallas_src>

<mosaic_0001>
module attributes {stable_mosaic.version = 11 : i64} {
  func.func @dqn_kernel(%arg0: i32, %arg1: memref<64x8xf32, #tpu.memory_space<vmem>>, %arg2: memref<8x128xf32, #tpu.memory_space<vmem>>, %arg3: memref<1x128xf32, #tpu.memory_space<vmem>>, %arg4: memref<128x128xf32, #tpu.memory_space<vmem>>, %arg5: memref<1x128xf32, #tpu.memory_space<vmem>>, %arg6: memref<128x4xf32, #tpu.memory_space<vmem>>, %arg7: memref<1x4xf32, #tpu.memory_space<vmem>>, %arg8: memref<64x4xf32, #tpu.memory_space<vmem>>) attributes {dimension_semantics = [#tpu.dimension_semantics<parallel>], iteration_bounds = array<i64: 4>, scalar_prefetch = 0 : i64, scratch_operands = 0 : i64, tpu.core_type = #tpu.core_type<tc>, window_params = [{transform_indices = @transform_0, window_bounds = array<i64: 64, 8>}, {pipeline_mode = #tpu.pipeline_mode<synchronous>, transform_indices = @transform_1, window_bounds = array<i64: 8, 128>}, {pipeline_mode = #tpu.pipeline_mode<synchronous>, transform_indices = @transform_2, window_bounds = array<i64: 1, 128>}, {pipeline_mode = #tpu.pipeline_mode<synchronous>, transform_indices = @transform_3, window_bounds = array<i64: 128, 128>}, {pipeline_mode = #tpu.pipeline_mode<synchronous>, transform_indices = @transform_4, window_bounds = array<i64: 1, 128>}, {pipeline_mode = #tpu.pipeline_mode<synchronous>, transform_indices = @transform_5, window_bounds = array<i64: 128, 4>}, {pipeline_mode = #tpu.pipeline_mode<synchronous>, transform_indices = @transform_6, window_bounds = array<i64: 1, 4>}, {transform_indices = @transform_7, window_bounds = array<i64: 64, 4>}]} {
    %c0 = arith.constant 0 : index
    %c0_0 = arith.constant 0 : index
    %0 = vector.load %arg1[%c0, %c0_0] : memref<64x8xf32, #tpu.memory_space<vmem>>, vector<64x8xf32>
    %c0_1 = arith.constant 0 : index
    %c0_2 = arith.constant 0 : index
    %1 = vector.load %arg2[%c0_1, %c0_2] : memref<8x128xf32, #tpu.memory_space<vmem>>, vector<8x128xf32>
    %cst = arith.constant dense<0.000000e+00> : vector<64x128xf32>
    %2 = tpu.matmul %0, %1, %cst {dimension_numbers = #tpu.dot_dimension_numbers<[1], [0], [0], [1], [0, 0, 1, 1], [], []>} : vector<64x8xf32>, vector<8x128xf32>, vector<64x128xf32> -> vector<64x128xf32>
    %c0_3 = arith.constant 0 : index
    %c0_4 = arith.constant 0 : index
    %3 = vector.load %arg3[%c0_3, %c0_4] : memref<1x128xf32, #tpu.memory_space<vmem>>, vector<1x128xf32>
    %4 = vector.broadcast %3 : vector<1x128xf32> to vector<64x128xf32>
    %5 = arith.addf %2, %4 : vector<64x128xf32>
    %cst_5 = arith.constant 0.000000e+00 : f32
    %6 = vector.broadcast %cst_5 : f32 to vector<64x128xf32>
    %7 = arith.maximumf %5, %6 : vector<64x128xf32>
    %c0_6 = arith.constant 0 : index
    %c0_7 = arith.constant 0 : index
    %8 = vector.load %arg4[%c0_6, %c0_7] : memref<128x128xf32, #tpu.memory_space<vmem>>, vector<128x128xf32>
    %cst_8 = arith.constant dense<0.000000e+00> : vector<64x128xf32>
    %9 = tpu.matmul %7, %8, %cst_8 {dimension_numbers = #tpu.dot_dimension_numbers<[1], [0], [0], [1], [0, 0, 1, 1], [], []>} : vector<64x128xf32>, vector<128x128xf32>, vector<64x128xf32> -> vector<64x128xf32>
    %c0_9 = arith.constant 0 : index
    %c0_10 = arith.constant 0 : index
    %10 = vector.load %arg5[%c0_9, %c0_10] : memref<1x128xf32, #tpu.memory_space<vmem>>, vector<1x128xf32>
    %11 = vector.broadcast %10 : vector<1x128xf32> to vector<64x128xf32>
    %12 = arith.addf %9, %11 : vector<64x128xf32>
    %cst_11 = arith.constant 0.000000e+00 : f32
    %13 = vector.broadcast %cst_11 : f32 to vector<64x128xf32>
    %14 = arith.maximumf %12, %13 : vector<64x128xf32>
    %c0_12 = arith.constant 0 : index
    %c0_13 = arith.constant 0 : index
    %15 = vector.load %arg6[%c0_12, %c0_13] : memref<128x4xf32, #tpu.memory_space<vmem>>, vector<128x4xf32>
    %cst_14 = arith.constant dense<0.000000e+00> : vector<64x4xf32>
    %16 = tpu.matmul %14, %15, %cst_14 {dimension_numbers = #tpu.dot_dimension_numbers<[1], [0], [0], [1], [0, 0, 1, 1], [], []>} : vector<64x128xf32>, vector<128x4xf32>, vector<64x4xf32> -> vector<64x4xf32>
    %c0_15 = arith.constant 0 : index
    %c0_16 = arith.constant 0 : index
    %17 = vector.load %arg7[%c0_15, %c0_16] : memref<1x4xf32, #tpu.memory_space<vmem>>, vector<1x4xf32>
    %18 = vector.broadcast %17 : vector<1x4xf32> to vector<64x4xf32>
    %19 = arith.addf %16, %18 : vector<64x4xf32>
    %c0_17 = arith.constant 0 : index
    %c0_18 = arith.constant 0 : index
    %20 = vector.load %arg8[%c0_17, %c0_18] : memref<64x4xf32, #tpu.memory_space<vmem>>, vector<64x4xf32>
    tpu.vector_store %arg8[%c0_17, %c0_18], %19 {strides = array<i32>} : memref<64x4xf32, #tpu.memory_space<vmem>>, vector<64x4xf32>,
    return
  }
  func.func @transform_0(%arg0: i32) -> (i32, i32) {
    %c0_i32 = arith.constant 0 : i32
    %c0_i32_0 = arith.constant 0 : i32
    return %arg0, %c0_i32 : i32, i32
  }
  func.func @transform_1(%arg0: i32) -> (i32, i32) {
    %c0_i32 = arith.constant 0 : i32
    %c0_i32_0 = arith.constant 0 : i32
    %c0_i32_1 = arith.constant 0 : i32
    return %c0_i32, %c0_i32_0 : i32, i32
  }
  func.func @transform_2(%arg0: i32) -> (i32, i32) {
    %c0_i32 = arith.constant 0 : i32
    %c0_i32_0 = arith.constant 0 : i32
    %c0_i32_1 = arith.constant 0 : i32
    return %c0_i32, %c0_i32_0 : i32, i32
  }
  func.func @transform_3(%arg0: i32) -> (i32, i32) {
    %c0_i32 = arith.constant 0 : i32
    %c0_i32_0 = arith.constant 0 : i32
    %c0_i32_1 = arith.constant 0 : i32
    return %c0_i32, %c0_i32_0 : i32, i32
  }
  func.func @transform_4(%arg0: i32) -> (i32, i32) {
    %c0_i32 = arith.constant 0 : i32
    %c0_i32_0 = arith.constant 0 : i32
    %c0_i32_1 = arith.constant 0 : i32
    return %c0_i32, %c0_i32_0 : i32, i32
  }
  func.func @transform_5(%arg0: i32) -> (i32, i32) {
    %c0_i32 = arith.constant 0 : i32
    %c0_i32_0 = arith.constant 0 : i32
    %c0_i32_1 = arith.constant 0 : i32
    return %c0_i32, %c0_i32_0 : i32, i32
  }
  func.func @transform_6(%arg0: i32) -> (i32, i32) {
    %c0_i32 = arith.constant 0 : i32
    %c0_i32_0 = arith.constant 0 : i32
    %c0_i32_1 = arith.constant 0 : i32
    return %c0_i32, %c0_i32_0 : i32, i32
  }
  func.func @transform_7(%arg0: i32) -> (i32, i32) {
    %c0_i32 = arith.constant 0 : i32
    %c0_i32_0 = arith.constant 0 : i32
    return %arg0, %c0_i32 : i32, i32
  }
}

</mosaic_0001>

<llo_original>
// kernel: tpu_custom_call.1
$region0: #{tpu_custom_call.1}
  #allocation0 [shape = 'u32[]', space=smem, size = 0x4, offset = 0x4, fixed_abs, tag = 'smem constant byte address 0x4 - core index']
  #allocation1 [shape = 'u32[144,128]{1,0:T(1,128)}', space=vmem, size = 0x12000, scoped, tag = 'internal scratch']
  %s0 = inlined_call_operand.vmem [shape: f32[200,8], index: 0, kind: input, shape index: {}]
  %s1 = inlined_call_operand.vmem [shape: f32[8,128], index: 1, kind: input, shape index: {}]
  %s2 = inlined_call_operand.vmem [shape: f32[1,128], index: 2, kind: input, shape index: {}]
  %s3 = inlined_call_operand.vmem [shape: f32[128,128], index: 3, kind: input, shape index: {}]
  %s4 = inlined_call_operand.vmem [shape: f32[1,128], index: 4, kind: input, shape index: {}]
  %s5 = inlined_call_operand.vmem [shape: f32[128,4], index: 5, kind: input, shape index: {}]
  %s6 = inlined_call_operand.vmem [shape: f32[1,4], index: 6, kind: input, shape index: {}]
  %s7 = inlined_call_operand.vmem [shape: f32[200,4], index: 7, kind: output, shape index: {}]
  %s8 = sld [smem:[#allocation0]]
  $region109: #{tpu_custom_call.1} parent=0
    _
  %s10 = ssub.s32 1, %s8
  %s11 = scalar_select 0, %s10, %s8
  $region1: #{tpu_custom_call.1} parent=0
    #allocation2 [shape = 'u8[65536]{0}', space=vmem, size = 0x10000, scoped, tag = 'output window, operand 0']
    loop: start=0, step=1, limit=6
    $region2: #{tpu_custom_call.1} parent=1 // loop_pre_header
      _
    $region3: #{tpu_custom_call.1} parent=1 // loop_header
      %s13 = sphi 0, %s17
      %p14 = scmp.ge.s32.totalorder %s13, 6
      %s23 = sphi 0, %s25
      %s26 = sphi 0, %s23
      %s27 = sphi 0, %s26
      %s43 = sphi 0, %s27
      %s47 = sphi 0, %s47
      %s49 = sphi 0, %s47
      %s50 = sphi 0, %s49
      %s64 = sphi 0, %s50
      %s68 = sphi 0, %s68
      %s70 = sphi 0, %s68
      %s71 = sphi 0, %s70
      %s85 = sphi 0, %s71
      %s89 = sphi 0, %s89
      %s91 = sphi 0, %s89
      %s92 = sphi 0, %s91
      %s106 = sphi 0, %s92
      %s110 = sphi 0, %s110
      %s112 = sphi 0, %s110
      %s113 = sphi 0, %s112
      %s127 = sphi 0, %s113
      %s131 = sphi 0, %s131
      %s133 = sphi 0, %s131
      %s134 = sphi 0, %s133
      %s148 = sphi 0, %s134
      %s152 = sphi 0, %s152
      %s154 = sphi 0, %s152
      %s155 = sphi 0, %s154
      %s169 = sphi 0, %s155
      %s175 = sphi 0, %s177
      %s178 = sphi 0, %s175
      %s179 = sphi 0, %s178
      %s195 = sphi 0, %s179
    $region4: #{tpu_custom_call.1} parent=1 // loop_header_branch
      %16 = sbr.rel (%p14) target = $region8
    $region5: #{tpu_custom_call.1} parent=1 // loop_body
      %s18 = ssub.s32 %s13, 1
      %s19 = ssub.s32 %s13, 2
      %s20 = sadd.s32 %s13, 1
      %s21 = ssub.s32 %s13, %s20
      %p22 = scmp.eq.s32.totalorder %s21, 0
      %s24 = sadd.s32 %s23, 1
      %s25 = scalar_select %p22, %s23, %s24
      %p28 = pneg %p22
      %p29 = scmp.eq.s32.totalorder %s13, 3
      %p30 = por %p28, %p29
      %p31 = scmp.ne.s32.totalorder %s23, %s26
      %p32 = scmp.eq.s32.totalorder %s13, 0
      %p33 = por %p31, %p32
      %p34 = scmp.ne.s32.totalorder %s23, %s26
      %p35 = scmp.eq.s32.totalorder %s18, 3
      %p36 = por %p34, %p35
      %p37 = scmp.ne.s32.totalorder %s26, %s27
      %p38 = scmp.eq.s32.totalorder %s18, 0
      %p39 = por %p37, %p38
      %p40 = scmp.ne.s32.totalorder %s26, %s27
      %p41 = scmp.eq.s32.totalorder %s19, 3
      %p42 = por %p40, %p41
      %p44 = scmp.ne.s32.totalorder %s27, %s43
      %p45 = scmp.eq.s32.totalorder %s19, 0
      %p46 = por %p44, %p45
      %s48 = sadd.s32 %s47, 1
      %p51 = scmp.eq.s32.totalorder %s13, 3
      %p52 = scmp.ne.s32.totalorder %s47, %s49
      %p53 = scmp.eq.s32.totalorder %s13, 0
      %p54 = por %p52, %p53
      %p55 = scmp.ne.s32.totalorder %s47, %s49
      %p56 = scmp.eq.s32.totalorder %s18, 3
      %p57 = por %p55, %p56
      %p58 = scmp.ne.s32.totalorder %s49, %s50
      %p59 = scmp.eq.s32.totalorder %s18, 0
      %p60 = por %p58, %p59
      %p61 = scmp.ne.s32.totalorder %s49, %s50
      %p62 = scmp.eq.s32.totalorder %s19, 3
      %p63 = por %p61, %p62
      %p65 = scmp.ne.s32.totalorder %s50, %s64
      %p66 = scmp.eq.s32.totalorder %s19, 0
      %p67 = por %p65, %p66
      %s69 = sadd.s32 %s68, 1
      %p72 = scmp.eq.s32.totalorder %s13, 3
      %p73 = scmp.ne.s32.totalorder %s68, %s70
      %p74 = scmp.eq.s32.totalorder %s13, 0
      %p75 = por %p73, %p74
      %p76 = scmp.ne.s32.totalorder %s68, %s70
      %p77 = scmp.eq.s32.totalorder %s18, 3
      %p78 = por %p76, %p77
      %p79 = scmp.ne.s32.totalorder %s70, %s71
      %p80 = scmp.eq.s32.totalorder %s18, 0
      %p81 = por %p79, %p80
      %p82 = scmp.ne.s32.totalorder %s70, %s71
      %p83 = scmp.eq.s32.totalorder %s19, 3
      %p84 = por %p82, %p83
      %p86 = scmp.ne.s32.totalorder %s71, %s85
      %p87 = scmp.eq.s32.totalorder %s19, 0
      %p88 = por %p86, %p87
      %s90 = sadd.s32 %s89, 1
      %p93 = scmp.eq.s32.totalorder %s13, 3
      %p94 = scmp.ne.s32.totalorder %s89, %s91
      %p95 = scmp.eq.s32.totalorder %s13, 0
      %p96 = por %p94, %p95
      %p97 = scmp.ne.s32.totalorder %s89, %s91
      %p98 = scmp.eq.s32.totalorder %s18, 3
      %p99 = por %p97, %p98
      %p100 = scmp.ne.s32.totalorder %s91, %s92
      %p101 = scmp.eq.s32.totalorder %s18, 0
      %p102 = por %p100, %p101
      %p103 = scmp.ne.s32.totalorder %s91, %s92
      %p104 = scmp.eq.s32.totalorder %s19, 3
      %p105 = por %p103, %p104
      %p107 = scmp.ne.s32.totalorder %s92, %s106
      %p108 = scmp.eq.s32.totalorder %s19, 0
      %p109 = por %p107, %p108
      %s111 = sadd.s32 %s110, 1
      %p114 = scmp.eq.s32.totalorder %s13, 3
      %p115 = scmp.ne.s32.totalorder %s110, %s112
      %p116 = scmp.eq.s32.totalorder %s13, 0
      %p117 = por %p115, %p116
      %p118 = scmp.ne.s32.totalorder %s110, %s112
      %p119 = scmp.eq.s32.totalorder %s18, 3
      %p120 = por %p118, %p119
      %p121 = scmp.ne.s32.totalorder %s112, %s113
      %p122 = scmp.eq.s32.totalorder %s18, 0
      %p123 = por %p121, %p122
      %p124 = scmp.ne.s32.totalorder %s112, %s113
      %p125 = scmp.eq.s32.totalorder %s19, 3
      %p126 = por %p124, %p125
      %p128 = scmp.ne.s32.totalorder %s113, %s127
      %p129 = scmp.eq.s32.totalorder %s19, 0
      %p130 = por %p128, %p129
      %s132 = sadd.s32 %s131, 1
      %p135 = scmp.eq.s32.totalorder %s13, 3
      %p136 = scmp.ne.s32.totalorder %s131, %s133
      %p137 = scmp.eq.s32.totalorder %s13, 0
      %p138 = por %p136, %p137
      %p139 = scmp.ne.s32.totalorder %s131, %s133
      %p140 = scmp.eq.s32.totalorder %s18, 3
      %p141 = por %p139, %p140
      %p142 = scmp.ne.s32.totalorder %s133, %s134
      %p143 = scmp.eq.s32.totalorder %s18, 0
      %p144 = por %p142, %p143
      %p145 = scmp.ne.s32.totalorder %s133, %s134
      %p146 = scmp.eq.s32.totalorder %s19, 3
      %p147 = por %p145, %p146
      %p149 = scmp.ne.s32.totalorder %s134, %s148
      %p150 = scmp.eq.s32.totalorder %s19, 0
      %p151 = por %p149, %p150
      %s153 = sadd.s32 %s152, 1
      %p156 = scmp.eq.s32.totalorder %s13, 3
      %p157 = scmp.ne.s32.totalorder %s152, %s154
      %p158 = scmp.eq.s32.totalorder %s13, 0
      %p159 = por %p157, %p158
      %p160 = scmp.ne.s32.totalorder %s152, %s154
      %p161 = scmp.eq.s32.totalorder %s18, 3
      %p162 = por %p160, %p161
      %p163 = scmp.ne.s32.totalorder %s154, %s155
      %p164 = scmp.eq.s32.totalorder %s18, 0
      %p165 = por %p163, %p164
      %p166 = scmp.ne.s32.totalorder %s154, %s155
      %p167 = scmp.eq.s32.totalorder %s19, 3
      %p168 = por %p166, %p167
      %p170 = scmp.ne.s32.totalorder %s155, %s169
      %p171 = scmp.eq.s32.totalorder %s19, 0
      %p172 = por %p170, %p171
      %s173 = ssub.s32 %s13, %s20
      %p174 = scmp.eq.s32.totalorder %s173, 0
      %s176 = sadd.s32 %s175, 1
      %s177 = scalar_select %p174, %s175, %s176
      %p180 = pneg %p174
      %p181 = scmp.eq.s32.totalorder %s13, 3
      %p182 = por %p180, %p181
      %p183 = scmp.ne.s32.totalorder %s175, %s178
      %p184 = scmp.eq.s32.totalorder %s13, 0
      %p185 = por %p183, %p184
      %p186 = scmp.ne.s32.totalorder %s175, %s178
      %p187 = scmp.eq.s32.totalorder %s18, 3
      %p188 = por %p186, %p187
      %p189 = scmp.ne.s32.totalorder %s178, %s179
      %p190 = scmp.eq.s32.totalorder %s18, 0
      %p191 = por %p189, %p190
      %p192 = scmp.ne.s32.totalorder %s178, %s179
      %p193 = scmp.eq.s32.totalorder %s19, 3
      %p194 = por %p192, %p193
      %p196 = scmp.ne.s32.totalorder %s179, %s195
      %p197 = scmp.eq.s32.totalorder %s19, 0
      %p198 = por %p196, %p197
      %p199 = scmp.le.s32.totalorder 1, %s13
      %p200 = scmp.lt.s32.totalorder %s13, 5
      %p201 = pnand %p199, %p200
      %p202 = pneg %p201
      // Predicated region
      $region9: #{tpu_custom_call.1} parent=5 // pred_check
        _
      $region10: #{tpu_custom_call.1} parent=5 // pred_check_branch
        %204 = sbr.rel (%p201) target = $region12
      $region11: #{tpu_custom_call.1} parent=5 // pred_region
        %s205 = ssub.s32 %s13, 1
        // Predicated region
        $region13: #{tpu_custom_call.1} parent=11 // pred_check
          %p206 = pneg %p60
        $region14: #{tpu_custom_call.1} parent=11 // pred_check_branch
          %208 = sbr.rel (%p206) target = $region16
        $region15: #{tpu_custom_call.1} parent=11 // pred_region
          _
        $region16: #{tpu_custom_call.1} parent=11 // pred_fallthru
          _
        // Predicated region
        $region17: #{tpu_custom_call.1} parent=11 // pred_check
          %p209 = pneg %p81
        $region18: #{tpu_custom_call.1} parent=11 // pred_check_branch
          %211 = sbr.rel (%p209) target = $region20
        $region19: #{tpu_custom_call.1} parent=11 // pred_region
          _
        $region20: #{tpu_custom_call.1} parent=11 // pred_fallthru
          _
        // Predicated region
        $region21: #{tpu_custom_call.1} parent=11 // pred_check
          %p212 = pneg %p102
        $region22: #{tpu_custom_call.1} parent=11 // pred_check_branch
          %214 = sbr.rel (%p212) target = $region24
        $region23: #{tpu_custom_call.1} parent=11 // pred_region
          _
        $region24: #{tpu_custom_call.1} parent=11 // pred_fallthru
          _
        // Predicated region
        $region25: #{tpu_custom_call.1} parent=11 // pred_check
          %p215 = pneg %p123
        $region26: #{tpu_custom_call.1} parent=11 // pred_check_branch
          %217 = sbr.rel (%p215) target = $region28
        $region27: #{tpu_custom_call.1} parent=11 // pred_region
          _
        $region28: #{tpu_custom_call.1} parent=11 // pred_fallthru
          _
        // Predicated region
        $region29: #{tpu_custom_call.1} parent=11 // pred_check
          %p218 = pneg %p144
        $region30: #{tpu_custom_call.1} parent=11 // pred_check_branch
          %220 = sbr.rel (%p218) target = $region32
        $region31: #{tpu_custom_call.1} parent=11 // pred_region
          _
        $region32: #{tpu_custom_call.1} parent=11 // pred_fallthru
          _
        // Predicated region
        $region33: #{tpu_custom_call.1} parent=11 // pred_check
          %p221 = pneg %p165
        $region34: #{tpu_custom_call.1} parent=11 // pred_check_branch
          %223 = sbr.rel (%p221) target = $region36
        $region35: #{tpu_custom_call.1} parent=11 // pred_region
          _
        $region36: #{tpu_custom_call.1} parent=11 // pred_fallthru
          _
      $region12: #{tpu_custom_call.1} parent=5 // pred_fallthru
        _
      %p224 = scmp.lt.s32.totalorder %s13, 4
      // Predicated region
      $region37: #{tpu_custom_call.1} parent=5 // pred_check
        %p225 = pneg %p224
      $region38: #{tpu_custom_call.1} parent=5 // pred_check_branch
        %227 = sbr.rel (%p225) target = $region40
      $region39: #{tpu_custom_call.1} parent=5 // pred_region
        // Predicated region
        $region41: #{tpu_custom_call.1} parent=39 // pred_check
          %p228 = pneg %p33
        $region42: #{tpu_custom_call.1} parent=39 // pred_check_branch
          %230 = sbr.rel (%p228) target = $region44
        $region43: #{tpu_custom_call.1} parent=39 // pred_region
          %s231 = smul.u32 8, %s13
          %s232 = ssub.s32 25, %s231
          %p233 = scmp.lt.s32.totalorder %s232, 8
          %s234 = scalar_select %p233, %s232, 8
          %s235 = smul.u32 128, %s234
          %p236 = scmp.lt.s32.totalorder %s231, 24
          %s237 = scalar_select %p236, %s231, 24
          %s238 = smul.addr %s237, 8
          %s239 = scalar_lea.vmem %s0, %s238
          %s240 = smul.u32 8, %s13
          %s241 = ssub.s32 25, %s240
          %p242 = scmp.lt.s32.totalorder %s241, 8
          %s243 = scalar_select %p242, %s241, 8
          %s244 = smul.u32 128, %s243
        $region44: #{tpu_custom_call.1} parent=39 // pred_fallthru
          _
      $region40: #{tpu_custom_call.1} parent=5 // pred_fallthru
        _
      %p245 = scmp.le.s32.totalorder 1, %s13
      %p246 = scmp.lt.s32.totalorder %s13, 5
      %p247 = pnand %p245, %p246
      %p248 = pneg %p247
      // Predicated region
      $region45: #{tpu_custom_call.1} parent=5 // pred_check
        _
      $region46: #{tpu_custom_call.1} parent=5 // pred_check_branch
        %250 = sbr.rel (%p247) target = $region48
      $region47: #{tpu_custom_call.1} parent=5 // pred_region
        %s251 = ssub.s32 %s13, 1
        %s252 = smul.u32 8, %s18
        %s253 = ssub.s32 25, %s252
        %p254 = scmp.lt.s32.totalorder %s253, 8
        %s255 = scalar_select %p254, %s253, 8
        %s256 = smul.u32 128, %s255
        %p257 = scmp.lt.s32.totalorder %s252, 24
        %s258 = scalar_select %p257, %s252, 24
        %s259 = smul.addr %s258, 8
        %s260 = scalar_lea.vmem %s0, %s259
        %p261 = pneg %p39
        %p262 = pneg %p36
        %p263 = pneg %p60
        %p264 = pneg %p57
        %p265 = pneg %p81
        %p266 = pneg %p78
        %p267 = pneg %p102
        %p268 = pneg %p99
        %p269 = pneg %p123
        %p270 = pneg %p120
        %p271 = pneg %p144
        %p272 = pneg %p141
        %p273 = pneg %p165
        %p274 = pneg %p162
        %p275 = pneg %p191
        %p276 = pneg %p188
        %s277 = sand.u32 %s178, 1
        %s278 = sand.u32 %s178, 1
        %s279 = smul.addr %s278, 64
        %s280 = scalar_lea.vmem [#allocation2], %s279
        %s281 = smul.u32 8, %s18
        %s282 = ssub.s32 25, %s281
        %p283 = scmp.lt.s32.totalorder %s282, 8
        %s284 = scalar_select %p283, %s282, 8
        %s285 = smul.u32 128, %s284
        %p286 = scmp.lt.s32.totalorder %s281, 24
        %s287 = scalar_select %p286, %s281, 24
        %s288 = smul.addr %s287, 8
        %s289 = scalar_lea.vmem %s0, %s288
        %s290 = smul.u32 8, %s18
        %s291 = ssub.s32 25, %s290
        %p292 = scmp.lt.s32.totalorder %s291, 8
        %s293 = scalar_select %p292, %s291, 8
        %s294 = smul.u32 128, %s293
        %s295 = smul.u32 8, %s18
        %s296 = ssub.s32 25, %s295
        %p297 = scmp.lt.s32.totalorder %s296, 8
        %s298 = scalar_select %p297, %s296, 8
        %s299 = smul.u32 128, %s298
        %v300 = vld [vmem:[%s289] sm:$0xff]
        %v301 = vld [vmem:[%s289 + $0x8] sm:$0xff]
        %v302 = vld [vmem:[%s289 + $0x10] sm:$0xff]
        %v303 = vld [vmem:[%s289 + $0x18] sm:$0xff]
        %v304 = vld [vmem:[%s289 + $0x20] sm:$0xff]
        %v305 = vld [vmem:[%s289 + $0x28] sm:$0xff]
        %v306 = vld [vmem:[%s289 + $0x30] sm:$0xff]
        %v307 = vld [vmem:[%s289 + $0x38] sm:$0xff]
        %v308 = vld [vmem:[%s1] sm:$0xff]
        %v309 = vld [vmem:[%s2] sm:$0x1]
        %v311 = vlaneseq
        %v312 = vshrl.u32 %v311, 7
        %v313 = vsub.s32 0, %v312
        %v314 = vrot.slane %v309, %v313
        %vm316 = vcmask 64512
        %v318 = vsel %vm316, %v300, 0
        %v321 = vsel %vm316, %v301, 0
        %v324 = vsel %vm316, %v302, 0
        %v327 = vsel %vm316, %v303, 0
        %v330 = vsel %vm316, %v304, 0
        %v333 = vsel %vm316, %v305, 0
        %v336 = vsel %vm316, %v306, 0
        %v339 = vsel %vm316, %v307, 0
        %341 = vmatprep.subr.mxu0 0.0
        %342 = vmatpush1.msra.mxu0 0.0
        %343 = vmatprep.subr.mxu0 0.0
        %344 = vmatpush1.msra.mxu0 0.0
        %345 = vmatprep.subr.mxu0 0.0
        %346 = vmatpush1.msra.mxu0 0.0
        %347 = vmatprep.subr.mxu0 0.0
        %348 = vmatpush1.msra.mxu0 0.0
        %349 = vmatprep.subr.mxu0 0.0
        %350 = vmatpush1.msra.mxu0 0.0
        %351 = vmatprep.subr.mxu0 0.0
        %352 = vmatpush1.msra.mxu0 0.0
        %353 = vmatprep.subr.mxu0 0.0
        %354 = vmatpush1.msra.mxu0 0.0
        %355 = vmatprep.subr.mxu0 0.0
        %356 = vmatpush1.msra.mxu0 0.0
        %357 = vmatprep.subr.mxu0 0.0
        %358 = vmatpush1.msra.mxu0 0.0
        %359 = vmatprep.subr.mxu0 0.0
        %360 = vmatpush1.msra.mxu0 0.0
        %361 = vmatprep.subr.mxu0 0.0
        %362 = vmatpush1.msra.mxu0 0.0
        %363 = vmatprep.subr.mxu0 0.0
        %364 = vmatpush1.msra.mxu0 0.0
        %365 = vmatprep.subr.mxu0 0.0
        %366 = vmatpush1.msra.mxu0 0.0
        %367 = vmatprep.subr.mxu0 0.0
        %368 = vmatpush1.msra.mxu0 0.0
        %369 = vmatprep.subr.mxu0 0.0
        %370 = vmatpush1.msra.mxu0 0.0
        %371 = vmatprep.subr.mxu0 0.0
        %372 = vmatpush1.msra.mxu0 %v308
        %373 = vmatprep.subr.mxu0 0.0
        %374 = vmatpush2.msra.mxu0 0.0
        %375 = vmatprep.subr.mxu0 0.0
        %376 = vmatpush2.msra.mxu0 0.0
        %377 = vmatprep.subr.mxu0 0.0
        %378 = vmatpush2.msra.mxu0 0.0
        %379 = vmatprep.subr.mxu0 0.0
        %380 = vmatpush2.msra.mxu0 0.0
        %381 = vmatprep.subr.mxu0 0.0
        %382 = vmatpush2.msra.mxu0 0.0
        %383 = vmatprep.subr.mxu0 0.0
        %384 = vmatpush2.msra.mxu0 0.0
        %385 = vmatprep.subr.mxu0 0.0
        %386 = vmatpush2.msra.mxu0 0.0
        %387 = vmatprep.subr.mxu0 0.0
        %388 = vmatpush2.msra.mxu0 0.0
        %389 = vmatprep.subr.mxu0 0.0
        %390 = vmatpush2.msra.mxu0 0.0
        %391 = vmatprep.subr.mxu0 0.0
        %392 = vmatpush2.msra.mxu0 0.0
        %393 = vmatprep.subr.mxu0 0.0
        %394 = vmatpush2.msra.mxu0 0.0
        %395 = vmatprep.subr.mxu0 0.0
        %396 = vmatpush2.msra.mxu0 0.0
        %397 = vmatprep.subr.mxu0 0.0
        %398 = vmatpush2.msra.mxu0 0.0
        %399 = vmatprep.subr.mxu0 0.0
        %400 = vmatpush2.msra.mxu0 0.0
        %401 = vmatprep.subr.mxu0 0.0
        %402 = vmatpush2.msra.mxu0 0.0
        %403 = vmatprep.subr.mxu0 0.0
        %404 = vmatpush2.msra.mxu0 0.0
        %405 = vmatprep.mubr.f32.mxu0 0.0
        %406 = vmatmul.mubr.f32.gmra.mxu0 %v318
        %v407 = vpop.f32.mrf.mxu0
        %v408 = vadd.f32 %v314, %v407
        %v409 = vpop.f32.mrf.mxu0
        %410 = vmatprep.mubr.f32.mxu0 0.0
        %411 = vmatmul.mubr.f32.gmra.mxu0 %v321
        %v412 = vpop.f32.mrf.mxu0
        %v413 = vadd.f32 %v314, %v412
        %v414 = vpop.f32.mrf.mxu0
        %415 = vmatprep.mubr.f32.mxu0 0.0
        %416 = vmatmul.mubr.f32.gmra.mxu0 %v324
        %v417 = vpop.f32.mrf.mxu0
        %v418 = vadd.f32 %v314, %v417
        %v419 = vpop.f32.mrf.mxu0
        %420 = vmatprep.mubr.f32.mxu0 0.0
        %421 = vmatmul.mubr.f32.gmra.mxu0 %v327
        %v422 = vpop.f32.mrf.mxu0
        %v423 = vadd.f32 %v314, %v422
        %v424 = vpop.f32.mrf.mxu0
        %425 = vmatprep.mubr.f32.mxu0 0.0
        %426 = vmatmul.mubr.f32.gmra.mxu0 %v330
        %v427 = vpop.f32.mrf.mxu0
        %v428 = vadd.f32 %v314, %v427
        %v429 = vpop.f32.mrf.mxu0
        %430 = vmatprep.mubr.f32.mxu0 0.0
        %431 = vmatmul.mubr.f32.gmra.mxu0 %v333
        %v432 = vpop.f32.mrf.mxu0
        %v433 = vadd.f32 %v314, %v432
        %v434 = vpop.f32.mrf.mxu0
        %435 = vmatprep.mubr.f32.mxu0 0.0
        %436 = vmatmul.mubr.f32.gmra.mxu0 %v336
        %v437 = vpop.f32.mrf.mxu0
        %v438 = vadd.f32 %v314, %v437
        %v439 = vpop.f32.mrf.mxu0
        %440 = vmatprep.mubr.f32.mxu0 0.0
        %441 = vmatmul.mubr.f32.gmra.mxu0 %v339
        %v442 = vpop.f32.mrf.mxu0
        %v443 = vadd.f32 %v314, %v442
        %v444 = vpop.f32.mrf.mxu0
        %445 = vdwg.mxu0
        %v446 = vmax.f32 %v408, 0.0
        %v447 = vmax.f32 %v413, 0.0
        %v448 = vmax.f32 %v418, 0.0
        %v449 = vmax.f32 %v423, 0.0
        %v450 = vmax.f32 %v428, 0.0
        %v451 = vmax.f32 %v433, 0.0
        %v452 = vmax.f32 %v438, 0.0
        %v453 = vmax.f32 %v443, 0.0
        %v454 = vld [vmem:[%s3] sm:$0xff]
        %v455 = vld [vmem:[%s3 + $0x8] sm:$0xff]
        %v456 = vld [vmem:[%s3 + $0x10] sm:$0xff]
        %v457 = vld [vmem:[%s3 + $0x18] sm:$0xff]
        %v458 = vld [vmem:[%s3 + $0x20] sm:$0xff]
        %v459 = vld [vmem:[%s3 + $0x28] sm:$0xff]
        %v460 = vld [vmem:[%s3 + $0x30] sm:$0xff]
        %v461 = vld [vmem:[%s3 + $0x38] sm:$0xff]
        %v462 = vld [vmem:[%s3 + $0x40] sm:$0xff]
        %v463 = vld [vmem:[%s3 + $0x48] sm:$0xff]
        %v464 = vld [vmem:[%s3 + $0x50] sm:$0xff]
        %v465 = vld [vmem:[%s3 + $0x58] sm:$0xff]
        %v466 = vld [vmem:[%s3 + $0x60] sm:$0xff]
        %v467 = vld [vmem:[%s3 + $0x68] sm:$0xff]
        %v468 = vld [vmem:[%s3 + $0x70] sm:$0xff]
        %v469 = vld [vmem:[%s3 + $0x78] sm:$0xff]
        %v470 = vld [vmem:[%s4] sm:$0x1]
        %v472 = vlaneseq
        %v473 = vshrl.u32 %v472, 7
        %v474 = vsub.s32 0, %v473
        %v475 = vrot.slane %v470, %v474
        %477 = vmatprep.subr.mxu0 0.0
        %478 = vmatpush1.msra.mxu0 %v469
        %479 = vmatprep.subr.mxu0 0.0
        %480 = vmatpush1.msra.mxu0 %v468
        %481 = vmatprep.subr.mxu0 0.0
        %482 = vmatpush1.msra.mxu0 %v467
        %483 = vmatprep.subr.mxu0 0.0
        %484 = vmatpush1.msra.mxu0 %v466
        %485 = vmatprep.subr.mxu0 0.0
        %486 = vmatpush1.msra.mxu0 %v465
        %487 = vmatprep.subr.mxu0 0.0
        %488 = vmatpush1.msra.mxu0 %v464
        %489 = vmatprep.subr.mxu0 0.0
        %490 = vmatpush1.msra.mxu0 %v463
        %491 = vmatprep.subr.mxu0 0.0
        %492 = vmatpush1.msra.mxu0 %v462
        %493 = vmatprep.subr.mxu0 0.0
        %494 = vmatpush1.msra.mxu0 %v461
        %495 = vmatprep.subr.mxu0 0.0
        %496 = vmatpush1.msra.mxu0 %v460
        %497 = vmatprep.subr.mxu0 0.0
        %498 = vmatpush1.msra.mxu0 %v459
        %499 = vmatprep.subr.mxu0 0.0
        %500 = vmatpush1.msra.mxu0 %v458
        %501 = vmatprep.subr.mxu0 0.0
        %502 = vmatpush1.msra.mxu0 %v457
        %503 = vmatprep.subr.mxu0 0.0
        %504 = vmatpush1.msra.mxu0 %v456
        %505 = vmatprep.subr.mxu0 0.0
        %506 = vmatpush1.msra.mxu0 %v455
        %507 = vmatprep.subr.mxu0 0.0
        %508 = vmatpush1.msra.mxu0 %v454
        %509 = vmatprep.subr.mxu0 0.0
        %510 = vmatpush2.msra.mxu0 0.0
        %511 = vmatprep.subr.mxu0 0.0
        %512 = vmatpush2.msra.mxu0 0.0
        %513 = vmatprep.subr.mxu0 0.0
        %514 = vmatpush2.msra.mxu0 0.0
        %515 = vmatprep.subr.mxu0 0.0
        %516 = vmatpush2.msra.mxu0 0.0
        %517 = vmatprep.subr.mxu0 0.0
        %518 = vmatpush2.msra.mxu0 0.0
        %519 = vmatprep.subr.mxu0 0.0
        %520 = vmatpush2.msra.mxu0 0.0
        %521 = vmatprep.subr.mxu0 0.0
        %522 = vmatpush2.msra.mxu0 0.0
        %523 = vmatprep.subr.mxu0 0.0
        %524 = vmatpush2.msra.mxu0 0.0
        %525 = vmatprep.subr.mxu0 0.0
        %526 = vmatpush2.msra.mxu0 0.0
        %527 = vmatprep.subr.mxu0 0.0
        %528 = vmatpush2.msra.mxu0 0.0
        %529 = vmatprep.subr.mxu0 0.0
        %530 = vmatpush2.msra.mxu0 0.0
        %531 = vmatprep.subr.mxu0 0.0
        %532 = vmatpush2.msra.mxu0 0.0
        %533 = vmatprep.subr.mxu0 0.0
        %534 = vmatpush2.msra.mxu0 0.0
        %535 = vmatprep.subr.mxu0 0.0
        %536 = vmatpush2.msra.mxu0 0.0
        %537 = vmatprep.subr.mxu0 0.0
        %538 = vmatpush2.msra.mxu0 0.0
        %539 = vmatprep.subr.mxu0 0.0
        %540 = vmatpush2.msra.mxu0 0.0
        %541 = vmatprep.mubr.f32.mxu0 0.0
        %542 = vmatmul.mubr.f32.gmra.mxu0 %v446
        %v543 = vpop.f32.mrf.mxu0
        %v544 = vadd.f32 %v475, %v543
        %v545 = vpop.f32.mrf.mxu0
        %546 = vmatprep.mubr.f32.mxu0 0.0
        %547 = vmatmul.mubr.f32.gmra.mxu0 %v447
        %v548 = vpop.f32.mrf.mxu0
        %v549 = vadd.f32 %v475, %v548
        %v550 = vpop.f32.mrf.mxu0
        %551 = vmatprep.mubr.f32.mxu0 0.0
        %552 = vmatmul.mubr.f32.gmra.mxu0 %v448
        %v553 = vpop.f32.mrf.mxu0
        %v554 = vadd.f32 %v475, %v553
        %v555 = vpop.f32.mrf.mxu0
        %556 = vmatprep.mubr.f32.mxu0 0.0
        %557 = vmatmul.mubr.f32.gmra.mxu0 %v449
        %v558 = vpop.f32.mrf.mxu0
        %v559 = vadd.f32 %v475, %v558
        %v560 = vpop.f32.mrf.mxu0
        %561 = vmatprep.mubr.f32.mxu0 0.0
        %562 = vmatmul.mubr.f32.gmra.mxu0 %v450
        %v563 = vpop.f32.mrf.mxu0
        %v564 = vadd.f32 %v475, %v563
        %v565 = vpop.f32.mrf.mxu0
        %566 = vmatprep.mubr.f32.mxu0 0.0
        %567 = vmatmul.mubr.f32.gmra.mxu0 %v451
        %v568 = vpop.f32.mrf.mxu0
        %v569 = vadd.f32 %v475, %v568
        %v570 = vpop.f32.mrf.mxu0
        %571 = vmatprep.mubr.f32.mxu0 0.0
        %572 = vmatmul.mubr.f32.gmra.mxu0 %v452
        %v573 = vpop.f32.mrf.mxu0
        %v574 = vadd.f32 %v475, %v573
        %v575 = vpop.f32.mrf.mxu0
        %576 = vmatprep.mubr.f32.mxu0 0.0
        %577 = vmatmul.mubr.f32.gmra.mxu0 %v453
        %v578 = vpop.f32.mrf.mxu0
        %v579 = vadd.f32 %v475, %v578
        %v580 = vpop.f32.mrf.mxu0
        %581 = vdwg.mxu0
        %v582 = vmax.f32 %v544, 0.0
        %v583 = vmax.f32 %v549, 0.0
        %v584 = vmax.f32 %v554, 0.0
        %v585 = vmax.f32 %v559, 0.0
        %v586 = vmax.f32 %v564, 0.0
        %v587 = vmax.f32 %v569, 0.0
        %v588 = vmax.f32 %v574, 0.0
        %v589 = vmax.f32 %v579, 0.0
        %v590 = vld [vmem:[%s5] sm:$0xff]
        %v591 = vld [vmem:[%s5 + $0x8] sm:$0xff]
        %v592 = vld [vmem:[%s5 + $0x10] sm:$0xff]
        %v593 = vld [vmem:[%s5 + $0x18] sm:$0xff]
        %v594 = vld [vmem:[%s5 + $0x20] sm:$0xff]
        %v595 = vld [vmem:[%s5 + $0x28] sm:$0xff]
        %v596 = vld [vmem:[%s5 + $0x30] sm:$0xff]
        %v597 = vld [vmem:[%s5 + $0x38] sm:$0xff]
        %v598 = vld [vmem:[%s5 + $0x40] sm:$0xff]
        %v599 = vld [vmem:[%s5 + $0x48] sm:$0xff]
        %v600 = vld [vmem:[%s5 + $0x50] sm:$0xff]
        %v601 = vld [vmem:[%s5 + $0x58] sm:$0xff]
        %v602 = vld [vmem:[%s5 + $0x60] sm:$0xff]
        %v603 = vld [vmem:[%s5 + $0x68] sm:$0xff]
        %v604 = vld [vmem:[%s5 + $0x70] sm:$0xff]
        %v605 = vld [vmem:[%s5 + $0x78] sm:$0xff]
        %v606 = vld [vmem:[%s6] sm:$0x1]
        %v608 = vlaneseq
        %v609 = vshrl.u32 %v608, 7
        %v610 = vsub.s32 0, %v609
        %v611 = vrot.slane %v606, %v610
        %613 = vmatprep.subr.mxu0 0.0
        %614 = vmatpush1.msra.mxu0 %v605
        %615 = vmatprep.subr.mxu0 0.0
        %616 = vmatpush1.msra.mxu0 %v604
        %617 = vmatprep.subr.mxu0 0.0
        %618 = vmatpush1.msra.mxu0 %v603
        %619 = vmatprep.subr.mxu0 0.0
        %620 = vmatpush1.msra.mxu0 %v602
        %621 = vmatprep.subr.mxu0 0.0
        %622 = vmatpush1.msra.mxu0 %v601
        %623 = vmatprep.subr.mxu0 0.0
        %624 = vmatpush1.msra.mxu0 %v600
        %625 = vmatprep.subr.mxu0 0.0
        %626 = vmatpush1.msra.mxu0 %v599
        %627 = vmatprep.subr.mxu0 0.0
        %628 = vmatpush1.msra.mxu0 %v598
        %629 = vmatprep.subr.mxu0 0.0
        %630 = vmatpush1.msra.mxu0 %v597
        %631 = vmatprep.subr.mxu0 0.0
        %632 = vmatpush1.msra.mxu0 %v596
        %633 = vmatprep.subr.mxu0 0.0
        %634 = vmatpush1.msra.mxu0 %v595
        %635 = vmatprep.subr.mxu0 0.0
        %636 = vmatpush1.msra.mxu0 %v594
        %637 = vmatprep.subr.mxu0 0.0
        %638 = vmatpush1.msra.mxu0 %v593
        %639 = vmatprep.subr.mxu0 0.0
        %640 = vmatpush1.msra.mxu0 %v592
        %641 = vmatprep.subr.mxu0 0.0
        %642 = vmatpush1.msra.mxu0 %v591
        %643 = vmatprep.subr.mxu0 0.0
        %644 = vmatpush1.msra.mxu0 %v590
        %645 = vmatprep.subr.mxu0 0.0
        %646 = vmatpush2.msra.mxu0 0.0
        %647 = vmatprep.subr.mxu0 0.0
        %648 = vmatpush2.msra.mxu0 0.0
        %649 = vmatprep.subr.mxu0 0.0
        %650 = vmatpush2.msra.mxu0 0.0
        %651 = vmatprep.subr.mxu0 0.0
        %652 = vmatpush2.msra.mxu0 0.0
        %653 = vmatprep.subr.mxu0 0.0
        %654 = vmatpush2.msra.mxu0 0.0
        %655 = vmatprep.subr.mxu0 0.0
        %656 = vmatpush2.msra.mxu0 0.0
        %657 = vmatprep.subr.mxu0 0.0
        %658 = vmatpush2.msra.mxu0 0.0
        %659 = vmatprep.subr.mxu0 0.0
        %660 = vmatpush2.msra.mxu0 0.0
        %661 = vmatprep.subr.mxu0 0.0
        %662 = vmatpush2.msra.mxu0 0.0
        %663 = vmatprep.subr.mxu0 0.0
        %664 = vmatpush2.msra.mxu0 0.0
        %665 = vmatprep.subr.mxu0 0.0
        %666 = vmatpush2.msra.mxu0 0.0
        %667 = vmatprep.subr.mxu0 0.0
        %668 = vmatpush2.msra.mxu0 0.0
        %669 = vmatprep.subr.mxu0 0.0
        %670 = vmatpush2.msra.mxu0 0.0
        %671 = vmatprep.subr.mxu0 0.0
        %672 = vmatpush2.msra.mxu0 0.0
        %673 = vmatprep.subr.mxu0 0.0
        %674 = vmatpush2.msra.mxu0 0.0
        %675 = vmatprep.subr.mxu0 0.0
        %676 = vmatpush2.msra.mxu0 0.0
        %677 = vmatprep.mubr.f32.mxu0 0.0
        %678 = vmatmul.mubr.f32.gmra.mxu0 %v582
        %v679 = vpop.f32.mrf.mxu0
        %v680 = vadd.f32 %v611, %v679
        %v681 = vpop.f32.mrf.mxu0
        %682 = vmatprep.mubr.f32.mxu0 0.0
        %683 = vmatmul.mubr.f32.gmra.mxu0 %v583
        %v684 = vpop.f32.mrf.mxu0
        %v685 = vadd.f32 %v611, %v684
        %v686 = vpop.f32.mrf.mxu0
        %687 = vmatprep.mubr.f32.mxu0 0.0
        %688 = vmatmul.mubr.f32.gmra.mxu0 %v584
        %v689 = vpop.f32.mrf.mxu0
        %v690 = vadd.f32 %v611, %v689
        %v691 = vpop.f32.mrf.mxu0
        %692 = vmatprep.mubr.f32.mxu0 0.0
        %693 = vmatmul.mubr.f32.gmra.mxu0 %v585
        %v694 = vpop.f32.mrf.mxu0
        %v695 = vadd.f32 %v611, %v694
        %v696 = vpop.f32.mrf.mxu0
        %697 = vmatprep.mubr.f32.mxu0 0.0
        %698 = vmatmul.mubr.f32.gmra.mxu0 %v586
        %v699 = vpop.f32.mrf.mxu0
        %v700 = vadd.f32 %v611, %v699
        %v701 = vpop.f32.mrf.mxu0
        %702 = vmatprep.mubr.f32.mxu0 0.0
        %703 = vmatmul.mubr.f32.gmra.mxu0 %v587
        %v704 = vpop.f32.mrf.mxu0
        %v705 = vadd.f32 %v611, %v704
        %v706 = vpop.f32.mrf.mxu0
        %707 = vmatprep.mubr.f32.mxu0 0.0
        %708 = vmatmul.mubr.f32.gmra.mxu0 %v588
        %v709 = vpop.f32.mrf.mxu0
        %v710 = vadd.f32 %v611, %v709
        %v711 = vpop.f32.mrf.mxu0
        %712 = vmatprep.mubr.f32.mxu0 0.0
        %713 = vmatmul.mubr.f32.gmra.mxu0 %v589
        %v714 = vpop.f32.mrf.mxu0
        %v715 = vadd.f32 %v611, %v714
        %v716 = vpop.f32.mrf.mxu0
        %717 = vdwg.mxu0
        %vm718 = vcmask 31744
        %719 = vst.msk [vmem:[%s280] sm:$0xff] %vm718, %v680
        %720 = vst.msk [vmem:[%s280 + $0x8] sm:$0xff] %vm718, %v685
        %721 = vst.msk [vmem:[%s280 + $0x10] sm:$0xff] %vm718, %v690
        %722 = vst.msk [vmem:[%s280 + $0x18] sm:$0xff] %vm718, %v695
        %723 = vst.msk [vmem:[%s280 + $0x20] sm:$0xff] %vm718, %v700
        %724 = vst.msk [vmem:[%s280 + $0x28] sm:$0xff] %vm718, %v705
        %725 = vst.msk [vmem:[%s280 + $0x30] sm:$0xff] %vm718, %v710
        %726 = vst.msk [vmem:[%s280 + $0x38] sm:$0xff] %vm718, %v715
        %s727 = sand.u32 %s178, 1
        %s728 = sand.u32 %s178, 1
        %s729 = smul.addr %s728, 64
        %s730 = scalar_lea.vmem [#allocation2], %s729
        // Predicated region
        $region49: #{tpu_custom_call.1} parent=47 // pred_check
          %p731 = pneg %p188
        $region50: #{tpu_custom_call.1} parent=47 // pred_check_branch
          %733 = sbr.rel (%p731) target = $region52
        $region51: #{tpu_custom_call.1} parent=47 // pred_region
          %s734 = smul.u32 8, %s18
          %s735 = ssub.s32 25, %s734
          %p736 = scmp.lt.s32.totalorder %s735, 8
          %s737 = scalar_select %p736, %s735, 8
          %s738 = smul.u32 128, %s737
          %p739 = scmp.ne.s32.totalorder 0, %s738
          %s740 = smul.addr %s734, 8
          %s741 = scalar_lea.vmem %s7, %s740
          // Predicated region
          $region53: #{tpu_custom_call.1} parent=51 // pred_check
            %p742 = pneg %p739
          $region54: #{tpu_custom_call.1} parent=51 // pred_check_branch
            %744 = sbr.rel (%p742) target = $region56
          $region55: #{tpu_custom_call.1} parent=51 // pred_region
            // Predicated region
            $region57: #{tpu_custom_call.1} parent=55 // pred_check
              _
            $region58: #{tpu_custom_call.1} parent=55 // pred_check_branch
              %746 = sbr.rel (0) target = $region60
            $region59: #{tpu_custom_call.1} parent=55 // pred_region
              // Predicated region
              $region79: #{tpu_custom_call.1} parent=59 // pred_check
                _
              $region80: #{tpu_custom_call.1} parent=59 // pred_check_branch
                %810 = sbr.rel (0) target = $region82
              $region81: #{tpu_custom_call.1} parent=59 // pred_region
                %s811 = sshrl.u32 %s737, 3
                // While loop
                $region83: #{tpu_custom_call.1} parent=81 // loop_pre_header
                  _
                $region84: #{tpu_custom_call.1} parent=81 // loop_header
                  %s813 = sphi 0, %s815
                  %p814 = scmp.ge.s32.totalorder %s813, %s811
                  %s818 = sphi 0, %s839
                  %s819 = sphi %s730, %s842
                  %s820 = sphi %s741, %s843
                $region85: #{tpu_custom_call.1} parent=81 // loop_header_branch
                  %817 = sbr.rel (%p814) target = $region89
                $region86: #{tpu_custom_call.1} parent=81 // loop_body
                  %v821 = vld [vmem:[%s819] sm:$0xff]
                  %822 = vst [vmem:[%s820] sm:$0xff] %v821
                  %v823 = vld [vmem:[%s819 + $0x8] sm:$0xff]
                  %824 = vst [vmem:[%s820 + $0x8] sm:$0xff] %v823
                  %v825 = vld [vmem:[%s819 + $0x10] sm:$0xff]
                  %826 = vst [vmem:[%s820 + $0x10] sm:$0xff] %v825
                  %v827 = vld [vmem:[%s819 + $0x18] sm:$0xff]
                  %828 = vst [vmem:[%s820 + $0x18] sm:$0xff] %v827
                  %v829 = vld [vmem:[%s819 + $0x20] sm:$0xff]
                  %830 = vst [vmem:[%s820 + $0x20] sm:$0xff] %v829
                  %v831 = vld [vmem:[%s819 + $0x28] sm:$0xff]
                  %832 = vst [vmem:[%s820 + $0x28] sm:$0xff] %v831
                  %v833 = vld [vmem:[%s819 + $0x30] sm:$0xff]
                  %834 = vst [vmem:[%s820 + $0x30] sm:$0xff] %v833
                  %v835 = vld [vmem:[%s819 + $0x38] sm:$0xff]
                  %836 = vst [vmem:[%s820 + $0x38] sm:$0xff] %v835
                  %s837 = sadd.s32 1, %s818
                  %p838 = scmp.ge.s32.totalorder %s837, %s811
                  %s839 = scalar_select %p838, 0, %s837
                  %s840 = smul.u32 %s839, 64
                  %s841 = smul.u32 %s839, 64
                  %s842 = scalar_lea.vmem %s730, %s840 [#allocation2]
                  %s843 = scalar_lea.vmem %s741, %s841
                $region87: #{tpu_custom_call.1} parent=81 // loop_footer
                  %s815 = sadd.s32 %s813, 1
                $region88: #{tpu_custom_call.1} parent=81 // loop_footer_branch
                  %812 = sbr.rel target = $region84
                $region89: #{tpu_custom_call.1} parent=81 // loop_exit
                  _
                %s844 = sshrl.u32 %s737, 3
                %s845 = sand.u32 %s737, 7
                %s846 = smul.u32 %s844, 8
                %s847 = smul.u32 8, %s846
                %s848 = scalar_lea.vmem %s730, %s847 [#allocation2]
                %s849 = smul.u32 8, %s846
                %s850 = scalar_lea.vmem %s741, %s849
                // While loop
                $region90: #{tpu_custom_call.1} parent=81 // loop_pre_header
                  _
                $region91: #{tpu_custom_call.1} parent=81 // loop_header
                  %s852 = sphi 0, %s854
                  %p853 = scmp.ge.s32.totalorder %s852, %s845
                  %s857 = sphi 0, %s864
                  %s858 = sphi %s848, %s867
                  %s859 = sphi %s850, %s868
                $region92: #{tpu_custom_call.1} parent=81 // loop_header_branch
                  %856 = sbr.rel (%p853) target = $region96
                $region93: #{tpu_custom_call.1} parent=81 // loop_body
                  %v860 = vld [vmem:[%s858] sm:$0xff]
                  %861 = vst [vmem:[%s859] sm:$0xff] %v860
                  %s862 = sadd.s32 1, %s857
                  %p863 = scmp.ge.s32.totalorder %s862, %s845
                  %s864 = scalar_select %p863, 0, %s862
                  %s865 = smul.u32 %s864, 8
                  %s866 = smul.u32 %s864, 8
                  %s867 = scalar_lea.vmem %s848, %s865 [#allocation2]
                  %s868 = scalar_lea.vmem %s850, %s866
                $region94: #{tpu_custom_call.1} parent=81 // loop_footer
                  %s854 = sadd.s32 %s852, 1
                $region95: #{tpu_custom_call.1} parent=81 // loop_footer_branch
                  %851 = sbr.rel target = $region91
                $region96: #{tpu_custom_call.1} parent=81 // loop_exit
                  _
              $region82: #{tpu_custom_call.1} parent=59 // pred_fallthru
                _
              // Predicated region
              $region97: #{tpu_custom_call.1} parent=59 // pred_check
                _
              $region98: #{tpu_custom_call.1} parent=59 // pred_check_branch
                %870 = sbr.rel target = $region100
              $region99: #{tpu_custom_call.1} parent=59 // pred_region
                _
              $region100: #{tpu_custom_call.1} parent=59 // pred_fallthru
                _
            $region60: #{tpu_custom_call.1} parent=55 // pred_fallthru
              _
            // Predicated region
            $region61: #{tpu_custom_call.1} parent=55 // pred_check
              _
            $region62: #{tpu_custom_call.1} parent=55 // pred_check_branch
              %748 = sbr.rel target = $region64
            $region63: #{tpu_custom_call.1} parent=55 // pred_region
              %s750 = ssub.s32 256, 1
              %s751 = sshrl.u32 %s737, 3
              // While loop
              $region65: #{tpu_custom_call.1} parent=63 // loop_pre_header
                _
              $region66: #{tpu_custom_call.1} parent=63 // loop_header
                %s753 = sphi 0, %s755
                %p754 = scmp.ge.s32.totalorder %s753, %s751
                %s758 = sphi 0, %s779
                %s759 = sphi %s730, %s782
                %s760 = sphi %s741, %s783
              $region67: #{tpu_custom_call.1} parent=63 // loop_header_branch
                %757 = sbr.rel (%p754) target = $region71
              $region68: #{tpu_custom_call.1} parent=63 // loop_body
                %v761 = vld [vmem:[%s759] sm:%s750]
                %762 = vst [vmem:[%s760] sm:%s750] %v761
                %v763 = vld [vmem:[%s759 + $0x8] sm:%s750]
                %764 = vst [vmem:[%s760 + $0x8] sm:%s750] %v763
                %v765 = vld [vmem:[%s759 + $0x10] sm:%s750]
                %766 = vst [vmem:[%s760 + $0x10] sm:%s750] %v765
                %v767 = vld [vmem:[%s759 + $0x18] sm:%s750]
                %768 = vst [vmem:[%s760 + $0x18] sm:%s750] %v767
                %v769 = vld [vmem:[%s759 + $0x20] sm:%s750]
                %770 = vst [vmem:[%s760 + $0x20] sm:%s750] %v769
                %v771 = vld [vmem:[%s759 + $0x28] sm:%s750]
                %772 = vst [vmem:[%s760 + $0x28] sm:%s750] %v771
                %v773 = vld [vmem:[%s759 + $0x30] sm:%s750]
                %774 = vst [vmem:[%s760 + $0x30] sm:%s750] %v773
                %v775 = vld [vmem:[%s759 + $0x38] sm:%s750]
                %776 = vst [vmem:[%s760 + $0x38] sm:%s750] %v775
                %s777 = sadd.s32 1, %s758
                %p778 = scmp.ge.s32.totalorder %s777, %s751
                %s779 = scalar_select %p778, 0, %s777
                %s780 = smul.u32 %s779, 64
                %s781 = smul.u32 %s779, 64
                %s782 = scalar_lea.vmem %s730, %s780 [#allocation2]
                %s783 = scalar_lea.vmem %s741, %s781
              $region69: #{tpu_custom_call.1} parent=63 // loop_footer
                %s755 = sadd.s32 %s753, 1
              $region70: #{tpu_custom_call.1} parent=63 // loop_footer_branch
                %752 = sbr.rel target = $region66
              $region71: #{tpu_custom_call.1} parent=63 // loop_exit
                _
              %s784 = sshrl.u32 %s737, 3
              %s785 = sand.u32 %s737, 7
              %s786 = smul.u32 %s784, 8
              %s787 = smul.u32 8, %s786
              %s788 = scalar_lea.vmem %s730, %s787 [#allocation2]
              %s789 = smul.u32 8, %s786
              %s790 = scalar_lea.vmem %s741, %s789
              // While loop
              $region72: #{tpu_custom_call.1} parent=63 // loop_pre_header
                _
              $region73: #{tpu_custom_call.1} parent=63 // loop_header
                %s792 = sphi 0, %s794
                %p793 = scmp.ge.s32.totalorder %s792, %s785
                %s797 = sphi 0, %s804
                %s798 = sphi %s788, %s807
                %s799 = sphi %s790, %s808
              $region74: #{tpu_custom_call.1} parent=63 // loop_header_branch
                %796 = sbr.rel (%p793) target = $region78
              $region75: #{tpu_custom_call.1} parent=63 // loop_body
                %v800 = vld [vmem:[%s798] sm:%s750]
                %801 = vst [vmem:[%s799] sm:%s750] %v800
                %s802 = sadd.s32 1, %s797
                %p803 = scmp.ge.s32.totalorder %s802, %s785
                %s804 = scalar_select %p803, 0, %s802
                %s805 = smul.u32 %s804, 8
                %s806 = smul.u32 %s804, 8
                %s807 = scalar_lea.vmem %s788, %s805 [#allocation2]
                %s808 = scalar_lea.vmem %s790, %s806
              $region76: #{tpu_custom_call.1} parent=63 // loop_footer
                %s794 = sadd.s32 %s792, 1
              $region77: #{tpu_custom_call.1} parent=63 // loop_footer_branch
                %791 = sbr.rel target = $region73
              $region78: #{tpu_custom_call.1} parent=63 // loop_exit
                _
            $region64: #{tpu_custom_call.1} parent=55 // pred_fallthru
              _
          $region56: #{tpu_custom_call.1} parent=51 // pred_fallthru
            _
          %871 = vnop
        $region52: #{tpu_custom_call.1} parent=47 // pred_fallthru
          _
      $region48: #{tpu_custom_call.1} parent=5 // pred_fallthru
        _
      %p872 = scmp.le.s32.totalorder 2, %s13
      // Predicated region
      $region101: #{tpu_custom_call.1} parent=5 // pred_check
        %p873 = pneg %p872
      $region102: #{tpu_custom_call.1} parent=5 // pred_check_branch
        %875 = sbr.rel (%p873) target = $region104
      $region103: #{tpu_custom_call.1} parent=5 // pred_region
        %s876 = ssub.s32 %s13, 2
        // Predicated region
        $region105: #{tpu_custom_call.1} parent=103 // pred_check
          %p877 = pneg %p194
        $region106: #{tpu_custom_call.1} parent=103 // pred_check_branch
          %879 = sbr.rel (%p877) target = $region108
        $region107: #{tpu_custom_call.1} parent=103 // pred_region
          %s880 = sand.u32 %s179, 1
          %s881 = sand.u32 %s179, 1
          %s882 = smul.addr %s881, 64
          %s883 = scalar_lea.vmem [#allocation2], %s882
        $region108: #{tpu_custom_call.1} parent=103 // pred_fallthru
          _
      $region104: #{tpu_custom_call.1} parent=5 // pred_fallthru
        _
    $region6: #{tpu_custom_call.1} parent=1 // loop_footer
      %s17 = sadd.s32 1, %s13
    $region7: #{tpu_custom_call.1} parent=1 // loop_footer_branch
      %12 = sbr.rel target = $region3
    $region8: #{tpu_custom_call.1} parent=1 // loop_exit
      _

</llo_original>
